<compile_context>
chip_gen: v5e
topology: v5e:2x2
jax: 0.10.0
libtpu: 0.0.40
codegen_flags: <defaults>
</compile_context>

<pallas_src>
import functools
import math

import jax
import jax.numpy as jnp
from jax import lax
from jax.experimental import pallas as pl
from jax.experimental.pallas import tpu as pltpu

N_EMBD = 128  # fixed by the module


def _cross_attn_kernel(x1_ref, x2_ref, wqk_ref, wv_ref, o_ref, *, bb, t1, t2,
                       compute_dtype):
    c = x1_ref.shape[-1]
    hp = wv_ref.shape[-1]

    # Cast inside the kernel (VPU filler under the MXU); wrapper passes f32
    # activations straight through so HBM is only read once.
    x1 = x1_ref[...].astype(compute_dtype)      # (bb, t1, C)
    x2 = x2_ref[...].astype(compute_dtype)      # (bb, t2, C)

    # Projections as single big 2D MXU matmuls over all batches in the block.
    qk = jnp.dot(x1.reshape(bb * t1, c), wqk_ref[...],
                 preferred_element_type=jnp.float32)             # (bb*t1, C)  f32
    v = jnp.dot(x2.reshape(bb * t2, c), wv_ref[...],
                preferred_element_type=jnp.float32)              # (bb*t2, Hp) f32

    # scores[b] = (x1[b] @ Wqk) @ x2[b]^T == (Q @ K^T) * scale
    # (Wqk = (Wq*scale) @ Wk^T folded in the wrapper -> 128-deep contraction.)
    scores = lax.dot_general(
        qk.reshape(bb, t1, c).astype(compute_dtype), x2,
        dimension_numbers=(((2,), (2,)), ((0,), (0,))),
        preferred_element_type=jnp.float32)                      # (bb, t1, t2)

    # One batched, numerically stable softmax in f32 (single reduce/exp chain
    # for the whole block). Exact divide: approx reciprocal broke the strict
    # f32 tolerance check.
    m = jnp.max(scores, axis=-1, keepdims=True)
    e = jnp.exp(scores - m)
    attn = e / jnp.sum(e, axis=-1, keepdims=True)                # f32

    # dropout(p=0.0) is the identity.
    ctx = lax.dot_general(
        attn.astype(compute_dtype),
        v.reshape(bb, t2, hp).astype(compute_dtype),
        dimension_numbers=(((2,), (1,)), ((0,), (0,))),
        preferred_element_type=jnp.float32)                      # (bb, t1, Hp)

    # Direct, lane-dense store of the whole block (no concatenate).
    o_ref[...] = ctx.astype(o_ref.dtype)


def cross_attention(x1, x2, wq, wk, wv, *, batch_block=None,
                    compute_dtype=jnp.float32):
    """x1: (B, T1, C), x2: (B, T2, C), w*: (C, H) (pre-transposed nn.Linear
    weights). Returns (B, T1, H) in float32."""
    B, T1, C = x1.shape
    B2, T2, C2 = x2.shape
    assert B == B2 and C == C2 == N_EMBD
    H = wq.shape[1]
    assert wk.shape == (C, H) and wv.shape == (C, H)
    assert T1 % 8 == 0 and T2 % 8 == 0, "T1/T2 must be multiples of 8 (sublanes)"

    if batch_block is None:
        # v5e/v6e (1 TensorCore): merge the whole batch into one grid step.
        # On v7x (2 TCs/chip) pass batch_block=B//2 so the "parallel" grid axis
        # has work for both cores.
        batch_block = B
    assert B % batch_block == 0
    num_blocks = B // batch_block

    scale = 1.0 / math.sqrt(C)   # matches PyTorch: scores / C ** 0.5 (C = n_embd)

    # Fold Q and K projections (and the scale) into one lane-dense (C, C)
    # operand:  scores = x1 @ Wqk @ x2^T  with  Wqk = (Wq*scale) @ Wk^T.
    wqk = jnp.dot(wq * scale, wk.T,
                  precision=lax.Precision.HIGHEST).astype(compute_dtype)

    # Zero-pad Wv so V / context / output last dim is a multiple of 128 lanes.
    Hp = max(128, ((H + 127) // 128) * 128)
    wv_p = wv if Hp == H else jnp.pad(wv, ((0, 0), (0, Hp - H)))
    wv_c = wv_p.astype(compute_dtype)

    kernel = functools.partial(_cross_attn_kernel, bb=batch_block, t1=T1, t2=T2,
                               compute_dtype=compute_dtype)

    out = pl.pallas_call(
        kernel,
        out_shape=jax.ShapeDtypeStruct((B, T1, Hp), jnp.float32),
        grid_spec=pltpu.PrefetchScalarGridSpec(
            num_scalar_prefetch=0,
            grid=(num_blocks,),
            in_specs=[
                pl.BlockSpec((batch_block, T1, C), lambda i: (i, 0, 0)),
                pl.BlockSpec((batch_block, T2, C), lambda i: (i, 0, 0)),
                pl.BlockSpec((C, C), lambda i: (0, 0)),
                pl.BlockSpec((C, Hp), lambda i: (0, 0)),
            ],
            out_specs=pl.BlockSpec((batch_block, T1, Hp), lambda i: (i, 0, 0)),
        ),
        compiler_params=pltpu.CompilerParams(
            dimension_semantics=("parallel",),
            vmem_limit_bytes=32 * 1024 * 1024,
        ),
    )(x1, x2, wqk, wv_c)

    return out if Hp == H else out[:, :, :H]


def _reference(x1, x2, wq, wk, wv):
    hi = lax.Precision.HIGHEST
    q = jnp.einsum("btc,ch->bth", x1, wq, precision=hi)
    k = jnp.einsum("bsc,ch->bsh", x2, wk, precision=hi)
    v = jnp.einsum("bsc,ch->bsh", x2, wv, precision=hi)
    s = jnp.einsum("bth,bsh->bts", q, k, precision=hi) / math.sqrt(x1.shape[-1])
    w = jax.nn.softmax(s, axis=-1)
    return jnp.einsum("bts,bsh->bth", w, v, precision=hi)


if __name__ == "__main__":
    key = jax.random.PRNGKey(0)
    B, T1, T2, C, H = 2, 8, 8, N_EMBD, 64

    k1, k2, k3, k4, k5 = jax.random.split(key, 5)
    x1 = jax.random.normal(k1, (B, T1, C), dtype=jnp.float32)
    x2 = jax.random.normal(k2, (B, T2, C), dtype=jnp.float32)
    # nn.Linear(n_embd, head_size).weight has shape (H, C); store the transpose
    # (C, H) so the kernel computes x @ W directly on the MXU.
    init_scale = 1.0 / math.sqrt(C)
    wq = jax.random.uniform(k3, (C, H), jnp.float32, -init_scale, init_scale)
    wk = jax.random.uniform(k4, (C, H), jnp.float32, -init_scale, init_scale)
    wv = jax.random.uniform(k5, (C, H), jnp.float32, -init_scale, init_scale)

    ref = _reference(x1, x2, wq, wk, wv)

    # f32 MXU-operand path (exact softmax, suitable where accuracy matters).
    out = jax.block_until_ready(cross_attention(x1, x2, wq, wk, wv))
    assert out.shape == (B, T1, H)
    assert jnp.allclose(out, ref, atol=1e-2, rtol=1e-2), \
        float(jnp.max(jnp.abs(out - ref)))

    # bf16 MXU-operand fast path (recommended default on v6e/v7x); softmax f32.
    out_bf16 = jax.block_until_ready(
        cross_attention(x1, x2, wq, wk, wv, compute_dtype=jnp.bfloat16))
    assert out_bf16.shape == (B, T1, H)
    assert jnp.allclose(out_bf16, ref, atol=5e-2, rtol=5e-2), \
        float(jnp.max(jnp.abs(out_bf16 - ref)))

    # batch_block < B: two "parallel" grid steps (what you'd pick on v7x, 2 TCs).
    out_split = jax.block_until_ready(
        cross_attention(x1, x2, wq, wk, wv, batch_block=1))
    assert out_split.shape == (B, T1, H)
    assert jnp.allclose(out_split, ref, atol=1e-2, rtol=1e-2), \
        float(jnp.max(jnp.abs(out_split - ref)))

    print("KERNEL_OK")
</pallas_src>

<mosaic_0001>
module attributes {stable_mosaic.version = 11 : i64} {
  func.func @_cross_attn_kernel(%arg0: i32, %arg1: memref<2x8x128xf32, #tpu.memory_space<vmem>>, %arg2: memref<2x8x128xf32, #tpu.memory_space<vmem>>, %arg3: memref<128x128xf32, #tpu.memory_space<vmem>>, %arg4: memref<128x128xf32, #tpu.memory_space<vmem>>, %arg5: memref<2x8x128xf32, #tpu.memory_space<vmem>>) attributes {dimension_semantics = [#tpu.dimension_semantics<parallel>], iteration_bounds = array<i64: 1>, scalar_prefetch = 0 : i64, scratch_operands = 0 : i64, tpu.core_type = #tpu.core_type<tc>, window_params = [{transform_indices = @transform_0, window_bounds = array<i64: 2, 8, 128>}, {transform_indices = @transform_1, window_bounds = array<i64: 2, 8, 128>}, {pipeline_mode = #tpu.pipeline_mode<synchronous>, transform_indices = @transform_2, window_bounds = array<i64: 128, 128>}, {pipeline_mode = #tpu.pipeline_mode<synchronous>, transform_indices = @transform_3, window_bounds = array<i64: 128, 128>}, {transform_indices = @transform_4, window_bounds = array<i64: 2, 8, 128>}]} {
    %c0 = arith.constant 0 : index
    %c0_0 = arith.constant 0 : index
    %c0_1 = arith.constant 0 : index
    %0 = vector.load %arg1[%c0, %c0_0, %c0_1] : memref<2x8x128xf32, #tpu.memory_space<vmem>>, vector<2x8x128xf32>
    %c0_2 = arith.constant 0 : index
    %c0_3 = arith.constant 0 : index
    %c0_4 = arith.constant 0 : index
    %1 = vector.load %arg2[%c0_2, %c0_3, %c0_4] : memref<2x8x128xf32, #tpu.memory_space<vmem>>, vector<2x8x128xf32>
    %2 = vector.shape_cast %0 : vector<2x8x128xf32> to vector<16x128xf32>
    %c0_5 = arith.constant 0 : index
    %c0_6 = arith.constant 0 : index
    %3 = vector.load %arg3[%c0_5, %c0_6] : memref<128x128xf32, #tpu.memory_space<vmem>>, vector<128x128xf32>
    %cst = arith.constant dense<0.000000e+00> : vector<16x128xf32>
    %4 = tpu.matmul %2, %3, %cst {dimension_numbers = #tpu.dot_dimension_numbers<[1], [0], [0], [1], [0, 0, 1, 1], [], []>} : vector<16x128xf32>, vector<128x128xf32>, vector<16x128xf32> -> vector<16x128xf32>
    %5 = vector.shape_cast %1 : vector<2x8x128xf32> to vector<16x128xf32>
    %c0_7 = arith.constant 0 : index
    %c0_8 = arith.constant 0 : index
    %6 = vector.load %arg4[%c0_7, %c0_8] : memref<128x128xf32, #tpu.memory_space<vmem>>, vector<128x128xf32>
    %cst_9 = arith.constant dense<0.000000e+00> : vector<16x128xf32>
    %7 = tpu.matmul %5, %6, %cst_9 {dimension_numbers = #tpu.dot_dimension_numbers<[1], [0], [0], [1], [0, 0, 1, 1], [], []>} : vector<16x128xf32>, vector<128x128xf32>, vector<16x128xf32> -> vector<16x128xf32>
    %8 = vector.shape_cast %4 : vector<16x128xf32> to vector<2x8x128xf32>
    %cst_10 = arith.constant dense<0.000000e+00> : vector<2x8x8xf32>
    %9 = tpu.matmul %8, %1, %cst_10 {dimension_numbers = #tpu.dot_dimension_numbers<[2], [2], [1], [1], [0, 0, 0, 1, 1, 1], [0], [0]>} : vector<2x8x128xf32>, vector<2x8x128xf32>, vector<2x8x8xf32> -> vector<2x8x8xf32>
    %cst_11 = arith.constant dense<0xFF800000> : vector<2x8xf32>
    %10 = vector.multi_reduction <maximumf>, %9, %cst_11 [2] : vector<2x8x8xf32> to vector<2x8xf32>
    %11 = vector.shape_cast %10 : vector<2x8xf32> to vector<2x8x1xf32>
    %12 = vector.broadcast %11 : vector<2x8x1xf32> to vector<2x8x8xf32>
    %13 = arith.subf %9, %12 : vector<2x8x8xf32>
    %14 = math.exp %13 : vector<2x8x8xf32>
    %cst_12 = arith.constant dense<0.000000e+00> : vector<2x8xf32>
    %15 = vector.multi_reduction <add>, %14, %cst_12 [2] : vector<2x8x8xf32> to vector<2x8xf32>
    %16 = vector.shape_cast %15 : vector<2x8xf32> to vector<2x8x1xf32>
    %17 = vector.broadcast %16 : vector<2x8x1xf32> to vector<2x8x8xf32>
    %18 = arith.divf %14, %17 : vector<2x8x8xf32>
    %19 = vector.shape_cast %7 : vector<16x128xf32> to vector<2x8x128xf32>
    %cst_13 = arith.constant dense<0.000000e+00> : vector<2x8x128xf32>
    %20 = tpu.matmul %18, %19, %cst_13 {dimension_numbers = #tpu.dot_dimension_numbers<[2], [1], [1], [2], [0, 0, 0, 1, 1, 2], [0], [0]>} : vector<2x8x8xf32>, vector<2x8x128xf32>, vector<2x8x128xf32> -> vector<2x8x128xf32>
    %c0_14 = arith.constant 0 : index
    %c0_15 = arith.constant 0 : index
    %c0_16 = arith.constant 0 : index
    %21 = vector.load %arg5[%c0_14, %c0_15, %c0_16] : memref<2x8x128xf32, #tpu.memory_space<vmem>>, vector<2x8x128xf32>
    tpu.vector_store %arg5[%c0_14, %c0_15, %c0_16], %20 {strides = array<i32>} : memref<2x8x128xf32, #tpu.memory_space<vmem>>, vector<2x8x128xf32>,
    return
  }
  func.func @transform_0(%arg0: i32) -> (i32, i32, i32) {
    %c0_i32 = arith.constant 0 : i32
    %c0_i32_0 = arith.constant 0 : i32
    %c0_i32_1 = arith.constant 0 : i32
    return %arg0, %c0_i32, %c0_i32_0 : i32, i32, i32
  }
  func.func @transform_1(%arg0: i32) -> (i32, i32, i32) {
    %c0_i32 = arith.constant 0 : i32
    %c0_i32_0 = arith.constant 0 : i32
    %c0_i32_1 = arith.constant 0 : i32
    return %arg0, %c0_i32, %c0_i32_0 : i32, i32, i32
  }
  func.func @transform_2(%arg0: i32) -> (i32, i32) {
    %c0_i32 = arith.constant 0 : i32
    %c0_i32_0 = arith.constant 0 : i32
    %c0_i32_1 = arith.constant 0 : i32
    return %c0_i32, %c0_i32_0 : i32, i32
  }
  func.func @transform_3(%arg0: i32) -> (i32, i32) {
    %c0_i32 = arith.constant 0 : i32
    %c0_i32_0 = arith.constant 0 : i32
    %c0_i32_1 = arith.constant 0 : i32
    return %c0_i32, %c0_i32_0 : i32, i32
  }
  func.func @transform_4(%arg0: i32) -> (i32, i32, i32) {
    %c0_i32 = arith.constant 0 : i32
    %c0_i32_0 = arith.constant 0 : i32
    %c0_i32_1 = arith.constant 0 : i32
    return %arg0, %c0_i32, %c0_i32_0 : i32, i32, i32
  }
}

</mosaic_0001>

<llo_original>
// kernel: tpu_custom_call.1
$region0: #{tpu_custom_call.1}
  #allocation0 [shape = 'u32[]', space=smem, size = 0x4, offset = 0x4, fixed_abs, tag = 'smem constant byte address 0x4 - core index']
  #allocation1 [shape = 'u32[72,128]{1,0:T(1,128)}', space=vmem, size = 0x9000, scoped, tag = 'internal scratch']
  %s0 = inlined_call_operand.hbm [shape: f32[2,8,128], index: 0, kind: input, shape index: {}]
  %s1 = inlined_call_operand.hbm [shape: f32[2,8,128], index: 1, kind: input, shape index: {}]
  %s2 = inlined_call_operand.hbm [shape: f32[128,128], index: 2, kind: input, shape index: {}]
  %s3 = inlined_call_operand.hbm [shape: f32[128,128], index: 3, kind: input, shape index: {}]
  %s4 = inlined_call_operand.hbm [shape: f32[2,8,128], index: 4, kind: output, shape index: {}]
  %s5 = sld [smem:[#allocation0]]
  $region42: #{tpu_custom_call.1} parent=0
    _
  %s7 = ssub.s32 1, %s5
  %s8 = scalar_select 0, %s7, %s5
  $region1: #{tpu_custom_call.1} parent=0
    #allocation2 [shape = 'u8[8192]{0}', space=vmem, size = 0x2000, scoped, tag = 'input window, operand 0, single buffered']
    #allocation3 [shape = 's32[1]{0}', space=sflag, size = 0x4, scoped, tag = 'scoped memory for tpu_custom_call.1']
    #allocation4 [shape = 's32[1]{0}', space=sflag, size = 0x4, scoped, tag = 'scoped memory for tpu_custom_call.1']
    #allocation5 [shape = 'u8[8192]{0}', space=vmem, size = 0x2000, scoped, tag = 'input window, operand 1, single buffered']
    #allocation6 [shape = 's32[1]{0}', space=sflag, size = 0x4, scoped, tag = 'scoped memory for tpu_custom_call.1']
    #allocation7 [shape = 'u8[65536]{0}', space=vmem, size = 0x10000, scoped, tag = 'input window, operand 2, single buffered']
    #allocation8 [shape = 'u8[65536]{0}', space=vmem, size = 0x10000, scoped, tag = 'input window, operand 3, single buffered']
    #allocation9 [shape = 's32[1]{0}', space=sflag, size = 0x4, scoped, tag = 'scoped memory for tpu_custom_call.1']
    #allocation10 [shape = 'u8[8192]{0}', space=vmem, size = 0x2000, scoped, tag = 'output window, operand 0, single buffered']
    %9 = vsyncpa [#allocation3], 0
    %10 = vsyncpa [#allocation6], 0
    %11 = vsyncpa [#allocation9], 0
    %12 = vsyncpa [#allocation4], 0
    // Predicated region
    $region2: #{tpu_custom_call.1} parent=1 // pred_check
      _
    $region3: #{tpu_custom_call.1} parent=1 // pred_check_branch
      %14 = sbr.rel (0) target = $region5
    $region4: #{tpu_custom_call.1} parent=1 // pred_region
      %16 = vsyncadd [#allocation3], 0
      %s17 = sshll.u32 %s0, 4
      %s18 = int_to_ptr.hbm [resolvable:$true] %s17
      %s19 = sshll.u32 [#allocation2], 4
      %s20 = int_to_ptr.vmem [resolvable:$true] %s19
      %25 = dma.hbm_to_vmem [thread:$0]  %s18, 256, %s20, [#allocation3], 128, 128, 8
    $region5: #{tpu_custom_call.1} parent=1 // pred_fallthru
      _
    // Predicated region
    $region6: #{tpu_custom_call.1} parent=1 // pred_check
      _
    $region7: #{tpu_custom_call.1} parent=1 // pred_check_branch
      %27 = sbr.rel (0) target = $region9
    $region8: #{tpu_custom_call.1} parent=1 // pred_region
      %29 = vsyncadd [#allocation6], 0
      %s30 = sshll.u32 %s1, 4
      %s31 = int_to_ptr.hbm [resolvable:$true] %s30
      %s32 = sshll.u32 [#allocation5], 4
      %s33 = int_to_ptr.vmem [resolvable:$true] %s32
      %38 = dma.hbm_to_vmem [thread:$0]  %s31, 256, %s33, [#allocation6], 128, 128, 8
    $region9: #{tpu_custom_call.1} parent=1 // pred_fallthru
      _
    // Predicated region
    $region10: #{tpu_custom_call.1} parent=1 // pred_check
      _
    $region11: #{tpu_custom_call.1} parent=1 // pred_check_branch
      %40 = sbr.rel (0) target = $region13
    $region12: #{tpu_custom_call.1} parent=1 // pred_region
      %42 = vsyncadd [#allocation6], 0
      %s43 = sshll.u32 %s2, 4
      %s44 = int_to_ptr.hbm [resolvable:$true] %s43
      %s45 = sshll.u32 [#allocation7], 4
      %s46 = int_to_ptr.vmem [resolvable:$true] %s45
      %51 = dma.hbm_to_vmem [thread:$0]  %s44, 2048, %s46, [#allocation6], 128, 128, 8
    $region13: #{tpu_custom_call.1} parent=1 // pred_fallthru
      _
    // Predicated region
    $region14: #{tpu_custom_call.1} parent=1 // pred_check
      _
    $region15: #{tpu_custom_call.1} parent=1 // pred_check_branch
      %53 = sbr.rel (0) target = $region17
    $region16: #{tpu_custom_call.1} parent=1 // pred_region
      %55 = vsyncadd [#allocation9], 0
      %s56 = sshll.u32 %s3, 4
      %s57 = int_to_ptr.hbm [resolvable:$true] %s56
      %s58 = sshll.u32 [#allocation8], 4
      %s59 = int_to_ptr.vmem [resolvable:$true] %s58
      %64 = dma.hbm_to_vmem [thread:$0]  %s57, 2048, %s59, [#allocation9], 128, 128, 8
    $region17: #{tpu_custom_call.1} parent=1 // pred_fallthru
      _
    // Predicated region
    $region18: #{tpu_custom_call.1} parent=1 // pred_check
      _
    $region19: #{tpu_custom_call.1} parent=1 // pred_check_branch
      %66 = sbr.rel (0) target = $region21
    $region20: #{tpu_custom_call.1} parent=1 // pred_region
      %68 = dma.done [#allocation3], 256
    $region21: #{tpu_custom_call.1} parent=1 // pred_fallthru
      _
    // Predicated region
    $region22: #{tpu_custom_call.1} parent=1 // pred_check
      _
    $region23: #{tpu_custom_call.1} parent=1 // pred_check_branch
      %70 = sbr.rel (0) target = $region25
    $region24: #{tpu_custom_call.1} parent=1 // pred_region
      %72 = dma.done [#allocation6], 256
    $region25: #{tpu_custom_call.1} parent=1 // pred_fallthru
      _
    // Predicated region
    $region26: #{tpu_custom_call.1} parent=1 // pred_check
      _
    $region27: #{tpu_custom_call.1} parent=1 // pred_check_branch
      %74 = sbr.rel (0) target = $region29
    $region28: #{tpu_custom_call.1} parent=1 // pred_region
      %76 = dma.done [#allocation6], 2048
    $region29: #{tpu_custom_call.1} parent=1 // pred_fallthru
      _
    // Predicated region
    $region30: #{tpu_custom_call.1} parent=1 // pred_check
      _
    $region31: #{tpu_custom_call.1} parent=1 // pred_check_branch
      %78 = sbr.rel (0) target = $region33
    $region32: #{tpu_custom_call.1} parent=1 // pred_region
      %80 = dma.done [#allocation9], 2048
    $region33: #{tpu_custom_call.1} parent=1 // pred_fallthru
      _
    %v81 = vld [vmem:[#allocation2] sm:$0xff]
    %v82 = vld [vmem:[#allocation2 + $0x8] sm:$0xff]
    %v83 = vld [vmem:[#allocation5] sm:$0xff]
    %v84 = vld [vmem:[#allocation5 + $0x8] sm:$0xff]
    %v85 = vld [vmem:[#allocation7] sm:$0xff]
    %v86 = vld [vmem:[#allocation7 + $0x8] sm:$0xff]
    %v87 = vld [vmem:[#allocation7 + $0x10] sm:$0xff]
    %v88 = vld [vmem:[#allocation7 + $0x18] sm:$0xff]
    %v89 = vld [vmem:[#allocation7 + $0x20] sm:$0xff]
    %v90 = vld [vmem:[#allocation7 + $0x28] sm:$0xff]
    %v91 = vld [vmem:[#allocation7 + $0x30] sm:$0xff]
    %v92 = vld [vmem:[#allocation7 + $0x38] sm:$0xff]
    %v93 = vld [vmem:[#allocation7 + $0x40] sm:$0xff]
    %v94 = vld [vmem:[#allocation7 + $0x48] sm:$0xff]
    %v95 = vld [vmem:[#allocation7 + $0x50] sm:$0xff]
    %v96 = vld [vmem:[#allocation7 + $0x58] sm:$0xff]
    %v97 = vld [vmem:[#allocation7 + $0x60] sm:$0xff]
    %v98 = vld [vmem:[#allocation7 + $0x68] sm:$0xff]
    %v99 = vld [vmem:[#allocation7 + $0x70] sm:$0xff]
    %v100 = vld [vmem:[#allocation7 + $0x78] sm:$0xff]
    %101 = vmatpush.msra.mxu0 %v100
    %102 = vmatpush.msra.mxu0 %v99
    %103 = vmatpush.msra.mxu0 %v98
    %104 = vmatpush.msra.mxu0 %v97
    %105 = vmatpush.msra.mxu0 %v96
    %106 = vmatpush.msra.mxu0 %v95
    %107 = vmatpush.msra.mxu0 %v94
    %108 = vmatpush.msra.mxu0 %v93
    %109 = vmatpush.msra.mxu0 %v92
    %110 = vmatpush.msra.mxu0 %v91
    %111 = vmatpush.msra.mxu0 %v90
    %112 = vmatpush.msra.mxu0 %v89
    %113 = vmatpush.msra.mxu0 %v88
    %114 = vmatpush.msra.mxu0 %v87
    %115 = vmatpush.msra.mxu0 %v86
    %116 = vmatpush.msra.mxu0 %v85
    %117 = vmatmul.f32.gmra.mxu0 %v81
    %v118 = vpop.f32.mrf.mxu0
    %v119 = vadd.f32 0.0, %v118
    %120 = vmatmul.f32.gmra.mxu0 %v82
    %v121 = vpop.f32.mrf.mxu0
    %v122 = vadd.f32 0.0, %v121
    %123 = vdwg.mxu0
    %v124 = vld [vmem:[#allocation8] sm:$0xff]
    %v125 = vld [vmem:[#allocation8 + $0x8] sm:$0xff]
    %v126 = vld [vmem:[#allocation8 + $0x10] sm:$0xff]
    %v127 = vld [vmem:[#allocation8 + $0x18] sm:$0xff]
    %v128 = vld [vmem:[#allocation8 + $0x20] sm:$0xff]
    %v129 = vld [vmem:[#allocation8 + $0x28] sm:$0xff]
    %v130 = vld [vmem:[#allocation8 + $0x30] sm:$0xff]
    %v131 = vld [vmem:[#allocation8 + $0x38] sm:$0xff]
    %v132 = vld [vmem:[#allocation8 + $0x40] sm:$0xff]
    %v133 = vld [vmem:[#allocation8 + $0x48] sm:$0xff]
    %v134 = vld [vmem:[#allocation8 + $0x50] sm:$0xff]
    %v135 = vld [vmem:[#allocation8 + $0x58] sm:$0xff]
    %v136 = vld [vmem:[#allocation8 + $0x60] sm:$0xff]
    %v137 = vld [vmem:[#allocation8 + $0x68] sm:$0xff]
    %v138 = vld [vmem:[#allocation8 + $0x70] sm:$0xff]
    %v139 = vld [vmem:[#allocation8 + $0x78] sm:$0xff]
    %140 = vmatpush.msra.mxu0 %v139
    %141 = vmatpush.msra.mxu0 %v138
    %142 = vmatpush.msra.mxu0 %v137
    %143 = vmatpush.msra.mxu0 %v136
    %144 = vmatpush.msra.mxu0 %v135
    %145 = vmatpush.msra.mxu0 %v134
    %146 = vmatpush.msra.mxu0 %v133
    %147 = vmatpush.msra.mxu0 %v132
    %148 = vmatpush.msra.mxu0 %v131
    %149 = vmatpush.msra.mxu0 %v130
    %150 = vmatpush.msra.mxu0 %v129
    %151 = vmatpush.msra.mxu0 %v128
    %152 = vmatpush.msra.mxu0 %v127
    %153 = vmatpush.msra.mxu0 %v126
    %154 = vmatpush.msra.mxu0 %v125
    %155 = vmatpush.msra.mxu0 %v124
    %156 = vmatmul.f32.gmra.mxu0 %v83
    %v157 = vpop.f32.mrf.mxu0
    %v158 = vadd.f32 0.0, %v157
    %159 = vmatmul.f32.gmra.mxu0 %v84
    %v160 = vpop.f32.mrf.mxu0
    %v161 = vadd.f32 0.0, %v160
    %162 = vdwg.mxu0
    %163 = vmatpush.xpose.msra.mxu0 0.0
    %164 = vmatpush.xpose.msra.mxu0 0.0
    %165 = vmatpush.xpose.msra.mxu0 0.0
    %166 = vmatpush.xpose.msra.mxu0 0.0
    %167 = vmatpush.xpose.msra.mxu0 0.0
    %168 = vmatpush.xpose.msra.mxu0 0.0
    %169 = vmatpush.xpose.msra.mxu0 0.0
    %170 = vmatpush.xpose.msra.mxu0 0.0
    %171 = vmatpush.xpose.msra.mxu0 0.0
    %172 = vmatpush.xpose.msra.mxu0 0.0
    %173 = vmatpush.xpose.msra.mxu0 0.0
    %174 = vmatpush.xpose.msra.mxu0 0.0
    %175 = vmatpush.xpose.msra.mxu0 0.0
    %176 = vmatpush.xpose.msra.mxu0 0.0
    %177 = vmatpush.xpose.msra.mxu0 0.0
    %178 = vmatpush.xpose.msra.mxu0 %v83
    %179 = vmatmul.f32.gmra.mxu0 %v119
    %v180 = vpop.f32.mrf.mxu0
    %v181 = vadd.f32 0.0, %v180
    %182 = vdwg.mxu0
    %183 = vmatpush.xpose.msra.mxu0 0.0
    %184 = vmatpush.xpose.msra.mxu0 0.0
    %185 = vmatpush.xpose.msra.mxu0 0.0
    %186 = vmatpush.xpose.msra.mxu0 0.0
    %187 = vmatpush.xpose.msra.mxu0 0.0
    %188 = vmatpush.xpose.msra.mxu0 0.0
    %189 = vmatpush.xpose.msra.mxu0 0.0
    %190 = vmatpush.xpose.msra.mxu0 0.0
    %191 = vmatpush.xpose.msra.mxu0 0.0
    %192 = vmatpush.xpose.msra.mxu0 0.0
    %193 = vmatpush.xpose.msra.mxu0 0.0
    %194 = vmatpush.xpose.msra.mxu0 0.0
    %195 = vmatpush.xpose.msra.mxu0 0.0
    %196 = vmatpush.xpose.msra.mxu0 0.0
    %197 = vmatpush.xpose.msra.mxu0 0.0
    %198 = vmatpush.xpose.msra.mxu0 %v84
    %199 = vmatmul.f32.gmra.mxu0 %v122
    %v200 = vpop.f32.mrf.mxu0
    %v201 = vadd.f32 0.0, %v200
    %202 = vdwg.mxu0
    %vm203 = vcmask 64512
    %v204 = vsel %vm203, %v181, -inf
    %205 = vmax.xlane.f32.xlu0 %v204
    %v206 = vpop.xlane.xlu0 %205
    %v207 = vsel %vm203, %v201, -inf
    %208 = vmax.xlane.f32.xlu0 %v207
    %v209 = vpop.xlane.xlu0 %208
    %v210 = vsub.f32 %v181, %v206
    %v211 = vsub.f32 %v201, %v209
    %v212 = vmul.f32 %v210, 1.442695
    %v213 = vpow.pop %v212
    %v214 = vmul.f32 %v211, 1.442695
    %v215 = vpow.pop %v214
    %v216 = vsel %vm203, %v213, 0.0
    %217 = vadd.xlane.f32.xlu0 %v216
    %v218 = vpop.xlane.xlu0 %217
    %v219 = vsel %vm203, %v215, 0.0
    %220 = vadd.xlane.f32.xlu0 %v219
    %v221 = vpop.xlane.xlu0 %220
    %v222 = vrcp.pop %v218
    %v223 = vmul.f32 %v218, %v222
    %v224 = vsub.f32 1.0, %v223
    %v225 = vmul.f32 %v222, %v224
    %v226 = vadd.f32 %v222, %v225
    %vm227 = vweird.f32 %v218
    %vm228 = vweird.f32 %v222
    %vm229 = vmor %vm227, %vm228
    %v230 = vsel %vm229, %v222, %v226
    %v231 = vand.u32 2147483647, %v218
    %vm232 = vcmp.eq.f32.partialorder %v231, 8.507059e+37
    %v233 = vand.u32 %v218, 2147483648
    %v234 = vor.u32 1.1754944e-38, %v233
    %v235 = vsel %vm232, %v234, %v230
    %v236 = vmul.f32 %v213, %v235
    %v237 = vrcp.pop %v221
    %v238 = vmul.f32 %v221, %v237
    %v239 = vsub.f32 1.0, %v238
    %v240 = vmul.f32 %v237, %v239
    %v241 = vadd.f32 %v237, %v240
    %vm242 = vweird.f32 %v221
    %vm243 = vweird.f32 %v237
    %vm244 = vmor %vm242, %vm243
    %v245 = vsel %vm244, %v237, %v241
    %v246 = vand.u32 2147483647, %v221
    %vm247 = vcmp.eq.f32.partialorder %v246, 8.507059e+37
    %v248 = vand.u32 %v221, 2147483648
    %v249 = vor.u32 1.1754944e-38, %v248
    %v250 = vsel %vm247, %v249, %v245
    %v251 = vmul.f32 %v215, %v250
    %v253 = vsel %vm203, %v236, 0
    %255 = vmatpush.msra.mxu0 0.0
    %256 = vmatpush.msra.mxu0 0.0
    %257 = vmatpush.msra.mxu0 0.0
    %258 = vmatpush.msra.mxu0 0.0
    %259 = vmatpush.msra.mxu0 0.0
    %260 = vmatpush.msra.mxu0 0.0
    %261 = vmatpush.msra.mxu0 0.0
    %262 = vmatpush.msra.mxu0 0.0
    %263 = vmatpush.msra.mxu0 0.0
    %264 = vmatpush.msra.mxu0 0.0
    %265 = vmatpush.msra.mxu0 0.0
    %266 = vmatpush.msra.mxu0 0.0
    %267 = vmatpush.msra.mxu0 0.0
    %268 = vmatpush.msra.mxu0 0.0
    %269 = vmatpush.msra.mxu0 0.0
    %270 = vmatpush.msra.mxu0 %v158
    %271 = vmatmul.f32.gmra.mxu0 %v253
    %v272 = vpop.f32.mrf.mxu0
    %v273 = vadd.f32 0.0, %v272
    %274 = vdwg.mxu0
    %v276 = vsel %vm203, %v251, 0
    %278 = vmatpush.msra.mxu0 0.0
    %279 = vmatpush.msra.mxu0 0.0
    %280 = vmatpush.msra.mxu0 0.0
    %281 = vmatpush.msra.mxu0 0.0
    %282 = vmatpush.msra.mxu0 0.0
    %283 = vmatpush.msra.mxu0 0.0
    %284 = vmatpush.msra.mxu0 0.0
    %285 = vmatpush.msra.mxu0 0.0
    %286 = vmatpush.msra.mxu0 0.0
    %287 = vmatpush.msra.mxu0 0.0
    %288 = vmatpush.msra.mxu0 0.0
    %289 = vmatpush.msra.mxu0 0.0
    %290 = vmatpush.msra.mxu0 0.0
    %291 = vmatpush.msra.mxu0 0.0
    %292 = vmatpush.msra.mxu0 0.0
    %293 = vmatpush.msra.mxu0 %v161
    %294 = vmatmul.f32.gmra.mxu0 %v276
    %v295 = vpop.f32.mrf.mxu0
    %v296 = vadd.f32 0.0, %v295
    %297 = vdwg.mxu0
    %298 = vst [vmem:[#allocation10] sm:$0xff] %v273
    %299 = vst [vmem:[#allocation10 + $0x8] sm:$0xff] %v296
    // Predicated region
    $region34: #{tpu_custom_call.1} parent=1 // pred_check
      _
    $region35: #{tpu_custom_call.1} parent=1 // pred_check_branch
      %301 = sbr.rel (0) target = $region37
    $region36: #{tpu_custom_call.1} parent=1 // pred_region
      %303 = vsyncadd [#allocation4], 0
      %s304 = sshll.u32 [#allocation10], 4
      %s305 = int_to_ptr.vmem [resolvable:$true] %s304
      %s306 = sshll.u32 %s4, 4
      %s307 = int_to_ptr.hbm [resolvable:$true] %s306
      %312 = dma.vmem_to_hbm [thread:$0]  %s305, 256, %s307, [#allocation4], 128, 128, 8
    $region37: #{tpu_custom_call.1} parent=1 // pred_fallthru
      _
    // Predicated region
    $region38: #{tpu_custom_call.1} parent=1 // pred_check
      _
    $region39: #{tpu_custom_call.1} parent=1 // pred_check_branch
      %314 = sbr.rel (0) target = $region41
    $region40: #{tpu_custom_call.1} parent=1 // pred_region
      %316 = dma.done [#allocation4], 256
    $region41: #{tpu_custom_call.1} parent=1 // pred_fallthru
      _
    %317 = vsyncpa [#allocation3], 1
    %318 = vsyncpa [#allocation6], 1
    %319 = vsyncpa [#allocation9], 1
    %320 = vsyncpa [#allocation4], 1

</llo_original>
